<compile_context>
chip_gen: v5e
topology: v5e:2x2
jax: 0.10.0
libtpu: 0.0.40
codegen_flags: <defaults>
</compile_context>

<pallas_src>
import jax
import jax.numpy as jnp
from jax.experimental import pallas as pl
from jax.experimental.pallas import tpu as pltpu


def _round_up(x: int, m: int) -> int:
    return ((x + m - 1) // m) * m


def _crossmodal_weight_kernel(obs_ref, w1_ref, b1_ref, w2_ref, b2_ref, out_ref):
    """Fused MLP + log_softmax for one N-tile.

    obs_ref : (TN, D)  bf16  observation tile (streamed / double-buffered)
    w1_ref  : (D, H)   bf16  first linear weight   (VMEM-resident)
    b1_ref  : (1, H)   f32   first linear bias     (VMEM-resident)
    w2_ref  : (H, M)   f32   second linear weight  (VMEM-resident)
    b2_ref  : (1, M)   f32   second linear bias    (VMEM-resident)
    out_ref : (TN, M)  f32   log-modality weights (log_softmax over M)
    """
    x = obs_ref[...]                      # bf16 tile
    b1 = b1_ref[...]                      # read biases once per grid step
    b2 = b2_ref[...]

    # Hidden layer: bf16 x bf16 MXU matmul with f32 accumulation.
    h = jnp.dot(x, w1_ref[...], preferred_element_type=jnp.float32)
    h = jnp.maximum(h + b1, 0.0)          # f32 elementwise (v5e-safe)

    # Output logits per modality (f32 x f32, tiny N dim -> cheap).
    logits = jnp.dot(h, w2_ref[...], preferred_element_type=jnp.float32) + b2

    m_count = logits.shape[-1]
    if m_count == 2:
        # 2-lane logaddexp: avoids the cross-lane reduce over a 2-wide axis.
        l0 = logits[:, 0:1]
        l1 = logits[:, 1:2]
        mx = jnp.maximum(l0, l1)
        lse = mx + jnp.log1p(jnp.exp(-jnp.abs(l0 - l1)))
        out_ref[...] = logits - lse
    else:
        # General numerically stable log_softmax over the modality axis.
        mx = jnp.max(logits, axis=-1, keepdims=True)
        z = logits - mx
        lse = jnp.log(jnp.sum(jnp.exp(z), axis=-1, keepdims=True))
        out_ref[...] = z - lse


def crossmodal_weight_model(observations, w1, b1, w2, b2, *, block_n: int = 1024):
    """Returns log-modality weights of shape (N, modality_count).

    observations: (N, D) float; w1: (D, H); b1: (1, H); w2: (H, M); b2: (1, M).
    Weights are stored (in_features, out_features), i.e. x @ W == PyTorch's
    x @ W_linear.T.
    """
    n, d = observations.shape
    h = w1.shape[1]
    m = w2.shape[1]

    # Tile size over N: multiple of 16 (bf16 sublane packing); cap by block_n.
    tn = min(block_n, _round_up(n, 16))
    n_pad = _round_up(n, tn)

    # Stream observations / W1 as bf16 (halves HBM traffic); keep the rest f32.
    obs = observations.astype(jnp.bfloat16)
    if n_pad != n:
        obs = jnp.pad(obs, ((0, n_pad - n), (0, 0)))
    w1_bf = w1.astype(jnp.bfloat16)
    b1_f = b1.astype(jnp.float32)
    w2_f = w2.astype(jnp.float32)
    b2_f = b2.astype(jnp.float32)

    grid = (n_pad // tn,)

    cost = pl.CostEstimate(
        flops=2 * n_pad * d * h + 2 * n_pad * h * m + 6 * n_pad * m,
        transcendentals=n_pad * (m + 1),
        bytes_accessed=(obs.size * 2 + w1_bf.size * 2 + b1_f.size * 4
                        + w2_f.size * 4 + b2_f.size * 4 + n_pad * m * 4),
    )

    out = pl.pallas_call(
        _crossmodal_weight_kernel,
        out_shape=jax.ShapeDtypeStruct((n_pad, m), jnp.float32),
        grid=grid,
        in_specs=[
            pl.BlockSpec((tn, d), lambda i: (i, 0)),     # obs tile (streamed)
            pl.BlockSpec((d, h), lambda i: (0, 0)),      # W1 (resident)
            pl.BlockSpec((1, h), lambda i: (0, 0)),      # b1 (resident)
            pl.BlockSpec((h, m), lambda i: (0, 0)),      # W2 (resident)
            pl.BlockSpec((1, m), lambda i: (0, 0)),      # b2 (resident)
        ],
        out_specs=pl.BlockSpec((tn, m), lambda i: (i, 0)),
        compiler_params=pltpu.CompilerParams(
            dimension_semantics=("parallel",),           # v7x: shard N over 2 TCs
            vmem_limit_bytes=32 << 20,                   # v7x-safe scoped budget
        ),
        cost_estimate=cost,
    )(obs, w1_bf, b1_f, w2_f, b2_f)

    return out[:n]


def _reference(observations, w1, b1, w2, b2):
    """Pure-JAX reference matching the kernel's bf16-input / f32-accum math."""
    x = observations.astype(jnp.bfloat16)
    h = jnp.dot(x, w1.astype(jnp.bfloat16), preferred_element_type=jnp.float32)
    h = jnp.maximum(h + b1, 0.0)
    logits = jnp.dot(h, w2, preferred_element_type=jnp.float32) + b2
    return jax.nn.log_softmax(logits, axis=-1)


if __name__ == "__main__":
    # Small, deterministic example shapes.
    N = 8              # batch / particle count
    OBS_DIM = 32       # flattened observation dim
    HIDDEN = 64        # hidden width
    MODALITIES = 2     # modality_count

    key = jax.random.PRNGKey(0)
    k_obs, k_w1, k_b1, k_w2, k_b2 = jax.random.split(key, 5)

    observations = jax.random.normal(k_obs, (N, OBS_DIM), dtype=jnp.float32)
    w1 = jax.random.normal(k_w1, (OBS_DIM, HIDDEN), dtype=jnp.float32) * 0.1
    b1 = jax.random.normal(k_b1, (1, HIDDEN), dtype=jnp.float32) * 0.01
    w2 = jax.random.normal(k_w2, (HIDDEN, MODALITIES), dtype=jnp.float32) * 0.1
    b2 = jax.random.normal(k_b2, (1, MODALITIES), dtype=jnp.float32) * 0.01

    log_weights = crossmodal_weight_model(observations, w1, b1, w2, b2)
    jax.block_until_ready(log_weights)

    # Sanity: shape (N, modality_count), rows sum to 1 in prob space, matches ref.
    assert log_weights.shape == (N, MODALITIES)
    assert bool(jnp.allclose(jnp.sum(jnp.exp(log_weights), axis=-1), 1.0, atol=1e-5))
    ref = _reference(observations, w1, b1, w2, b2)
    assert bool(jnp.allclose(log_weights, ref, atol=1e-4, rtol=1e-4))

    print("KERNEL_OK")
</pallas_src>

<mosaic_0001>
module attributes {stable_mosaic.version = 11 : i64} {
  func.func @_crossmodal_weight_kernel(%arg0: i32, %arg1: memref<16x32xbf16, #tpu.memory_space<vmem>>, %arg2: memref<32x64xbf16, #tpu.memory_space<vmem>>, %arg3: memref<1x64xf32, #tpu.memory_space<vmem>>, %arg4: memref<64x2xf32, #tpu.memory_space<vmem>>, %arg5: memref<1x2xf32, #tpu.memory_space<vmem>>, %arg6: memref<16x2xf32, #tpu.memory_space<vmem>>) attributes {dimension_semantics = [#tpu.dimension_semantics<parallel>], iteration_bounds = array<i64: 1>, scalar_prefetch = 0 : i64, scratch_operands = 0 : i64, tpu.core_type = #tpu.core_type<tc>, window_params = [{transform_indices = @transform_0, window_bounds = array<i64: 16, 32>}, {pipeline_mode = #tpu.pipeline_mode<synchronous>, transform_indices = @transform_1, window_bounds = array<i64: 32, 64>}, {pipeline_mode = #tpu.pipeline_mode<synchronous>, transform_indices = @transform_2, window_bounds = array<i64: 1, 64>}, {pipeline_mode = #tpu.pipeline_mode<synchronous>, transform_indices = @transform_3, window_bounds = array<i64: 64, 2>}, {pipeline_mode = #tpu.pipeline_mode<synchronous>, transform_indices = @transform_4, window_bounds = array<i64: 1, 2>}, {transform_indices = @transform_5, window_bounds = array<i64: 16, 2>}]} {
    %c0 = arith.constant 0 : index
    %c0_0 = arith.constant 0 : index
    %0 = vector.load %arg1[%c0, %c0_0] : memref<16x32xbf16, #tpu.memory_space<vmem>>, vector<16x32xbf16>
    %c0_1 = arith.constant 0 : index
    %c0_2 = arith.constant 0 : index
    %1 = vector.load %arg3[%c0_1, %c0_2] : memref<1x64xf32, #tpu.memory_space<vmem>>, vector<1x64xf32>
    %c0_3 = arith.constant 0 : index
    %c0_4 = arith.constant 0 : index
    %2 = vector.load %arg5[%c0_3, %c0_4] : memref<1x2xf32, #tpu.memory_space<vmem>>, vector<1x2xf32>
    %c0_5 = arith.constant 0 : index
    %c0_6 = arith.constant 0 : index
    %3 = vector.load %arg2[%c0_5, %c0_6] : memref<32x64xbf16, #tpu.memory_space<vmem>>, vector<32x64xbf16>
    %cst = arith.constant dense<0.000000e+00> : vector<16x64xf32>
    %4 = tpu.matmul %0, %3, %cst {dimension_numbers = #tpu.dot_dimension_numbers<[1], [0], [0], [1], [0, 0, 1, 1], [], []>} : vector<16x32xbf16>, vector<32x64xbf16>, vector<16x64xf32> -> vector<16x64xf32>
    %5 = vector.broadcast %1 : vector<1x64xf32> to vector<16x64xf32>
    %6 = arith.addf %4, %5 : vector<16x64xf32>
    %cst_7 = arith.constant 0.000000e+00 : f32
    %7 = vector.broadcast %cst_7 : f32 to vector<16x64xf32>
    %8 = arith.maximumf %6, %7 : vector<16x64xf32>
    %c0_8 = arith.constant 0 : index
    %c0_9 = arith.constant 0 : index
    %9 = vector.load %arg4[%c0_8, %c0_9] : memref<64x2xf32, #tpu.memory_space<vmem>>, vector<64x2xf32>
    %cst_10 = arith.constant dense<0.000000e+00> : vector<16x2xf32>
    %10 = tpu.matmul %8, %9, %cst_10 {dimension_numbers = #tpu.dot_dimension_numbers<[1], [0], [0], [1], [0, 0, 1, 1], [], []>} : vector<16x64xf32>, vector<64x2xf32>, vector<16x2xf32> -> vector<16x2xf32>
    %11 = vector.broadcast %2 : vector<1x2xf32> to vector<16x2xf32>
    %12 = arith.addf %10, %11 : vector<16x2xf32>
    %13 = vector.extract_strided_slice %12 {offsets = [0, 0], sizes = [16, 1], strides = [1, 1]} : vector<16x2xf32> to vector<16x1xf32>
    %14 = vector.extract_strided_slice %12 {offsets = [0, 1], sizes = [16, 1], strides = [1, 1]} : vector<16x2xf32> to vector<16x1xf32>
    %15 = arith.maximumf %13, %14 : vector<16x1xf32>
    %16 = arith.subf %13, %14 : vector<16x1xf32>
    %17 = math.absf %16 : vector<16x1xf32>
    %cst_11 = arith.constant 0.000000e+00 : f32
    %18 = vector.broadcast %cst_11 : f32 to vector<16x1xf32>
    %19 = arith.subf %18, %17 : vector<16x1xf32>
    %20 = math.exp %19 : vector<16x1xf32>
    %21 = math.log1p %20 : vector<16x1xf32>
    %22 = arith.addf %15, %21 : vector<16x1xf32>
    %23 = vector.broadcast %22 : vector<16x1xf32> to vector<16x2xf32>
    %24 = arith.subf %12, %23 : vector<16x2xf32>
    %c0_12 = arith.constant 0 : index
    %c0_13 = arith.constant 0 : index
    %25 = vector.load %arg6[%c0_12, %c0_13] : memref<16x2xf32, #tpu.memory_space<vmem>>, vector<16x2xf32>
    tpu.vector_store %arg6[%c0_12, %c0_13], %24 {strides = array<i32>} : memref<16x2xf32, #tpu.memory_space<vmem>>, vector<16x2xf32>,
    return
  }
  func.func @transform_0(%arg0: i32) -> (i32, i32) {
    %c0_i32 = arith.constant 0 : i32
    %c0_i32_0 = arith.constant 0 : i32
    return %arg0, %c0_i32 : i32, i32
  }
  func.func @transform_1(%arg0: i32) -> (i32, i32) {
    %c0_i32 = arith.constant 0 : i32
    %c0_i32_0 = arith.constant 0 : i32
    %c0_i32_1 = arith.constant 0 : i32
    return %c0_i32, %c0_i32_0 : i32, i32
  }
  func.func @transform_2(%arg0: i32) -> (i32, i32) {
    %c0_i32 = arith.constant 0 : i32
    %c0_i32_0 = arith.constant 0 : i32
    %c0_i32_1 = arith.constant 0 : i32
    return %c0_i32, %c0_i32_0 : i32, i32
  }
  func.func @transform_3(%arg0: i32) -> (i32, i32) {
    %c0_i32 = arith.constant 0 : i32
    %c0_i32_0 = arith.constant 0 : i32
    %c0_i32_1 = arith.constant 0 : i32
    return %c0_i32, %c0_i32_0 : i32, i32
  }
  func.func @transform_4(%arg0: i32) -> (i32, i32) {
    %c0_i32 = arith.constant 0 : i32
    %c0_i32_0 = arith.constant 0 : i32
    %c0_i32_1 = arith.constant 0 : i32
    return %c0_i32, %c0_i32_0 : i32, i32
  }
  func.func @transform_5(%arg0: i32) -> (i32, i32) {
    %c0_i32 = arith.constant 0 : i32
    %c0_i32_0 = arith.constant 0 : i32
    return %arg0, %c0_i32 : i32, i32
  }
}

</mosaic_0001>

<llo_original>
// kernel: tpu_custom_call.1
$region0: #{tpu_custom_call.1}
  #allocation0 [shape = 'u32[]', space=smem, size = 0x4, offset = 0x4, fixed_abs, tag = 'smem constant byte address 0x4 - core index']
  #allocation1 [shape = 'u32[72,128]{1,0:T(1,128)}', space=vmem, size = 0x9000, scoped, tag = 'internal scratch']
  %s0 = inlined_call_operand.vmem [shape: bf16[16,32], index: 0, kind: input, shape index: {}]
  %s1 = inlined_call_operand.vmem [shape: bf16[32,64], index: 1, kind: input, shape index: {}]
  %s2 = inlined_call_operand.vmem [shape: f32[1,64], index: 2, kind: input, shape index: {}]
  %s3 = inlined_call_operand.vmem [shape: f32[64,2], index: 3, kind: input, shape index: {}]
  %s4 = inlined_call_operand.vmem [shape: f32[1,2], index: 4, kind: input, shape index: {}]
  %s5 = inlined_call_operand.vmem [shape: f32[16,2], index: 5, kind: output, shape index: {}]
  %s6 = sld [smem:[#allocation0]]
  $region30: #{tpu_custom_call.1} parent=0
    _
  %s8 = ssub.s32 1, %s6
  %s9 = scalar_select 0, %s8, %s6
  // Predicated region
  $region2: #{tpu_custom_call.1} parent=0 // pred_check
    _
  $region3: #{tpu_custom_call.1} parent=0 // pred_check_branch
    %11 = sbr.rel (0) target = $region5
  $region4: #{tpu_custom_call.1} parent=0 // pred_region
    _
  $region5: #{tpu_custom_call.1} parent=0 // pred_fallthru
    _
  // Predicated region
  $region6: #{tpu_custom_call.1} parent=0 // pred_check
    _
  $region7: #{tpu_custom_call.1} parent=0 // pred_check_branch
    %13 = sbr.rel (0) target = $region9
  $region8: #{tpu_custom_call.1} parent=0 // pred_region
    _
  $region9: #{tpu_custom_call.1} parent=0 // pred_fallthru
    _
  // Predicated region
  $region10: #{tpu_custom_call.1} parent=0 // pred_check
    _
  $region11: #{tpu_custom_call.1} parent=0 // pred_check_branch
    %15 = sbr.rel (0) target = $region13
  $region12: #{tpu_custom_call.1} parent=0 // pred_region
    _
  $region13: #{tpu_custom_call.1} parent=0 // pred_fallthru
    _
  // Predicated region
  $region14: #{tpu_custom_call.1} parent=0 // pred_check
    _
  $region15: #{tpu_custom_call.1} parent=0 // pred_check_branch
    %17 = sbr.rel (0) target = $region17
  $region16: #{tpu_custom_call.1} parent=0 // pred_region
    _
  $region17: #{tpu_custom_call.1} parent=0 // pred_fallthru
    _
  // Predicated region
  $region18: #{tpu_custom_call.1} parent=0 // pred_check
    _
  $region19: #{tpu_custom_call.1} parent=0 // pred_check_branch
    %19 = sbr.rel (0) target = $region21
  $region20: #{tpu_custom_call.1} parent=0 // pred_region
    _
  $region21: #{tpu_custom_call.1} parent=0 // pred_fallthru
    _
  %v21 = vld [vmem:[%s0] sm:$0xf]
  %v22 = vld [vmem:[%s0 + $0x4] sm:$0xf]
  %v23 = vld [vmem:[%s2] sm:$0x1]
  %v24 = vld [vmem:[%s4] sm:$0x1]
  %v25 = vld [vmem:[%s1] sm:$0xf]
  %v26 = vld [vmem:[%s1 + $0x4] sm:$0xf]
  %v27 = vld [vmem:[%s1 + $0x8] sm:$0xf]
  %v28 = vld [vmem:[%s1 + $0xc] sm:$0xf]
  %v30 = vperm.slane %v23, 0
  %v34 = vunpack.c.l.b16 %v21
  %v35 = vunpack.c.l.b16 %v22
  %v36 = vpack.c.b16 %v35, %v34
  %v41 = vunpack.c.l.b16 %v25
  %v42 = vunpack.c.l.b16 %v26
  %v43 = vunpack.c.l.b16 %v27
  %v44 = vunpack.c.l.b16 %v28
  %v45 = vpack.c.b16 %v42, %v41
  %v46 = vpack.c.b16 %v44, %v43
  %vm49 = vcmask 261120
  %v51 = vsel %vm49, %v36, 0
  %53 = vmatpush.bf16.msra.mxu0 0
  %54 = vmatpush.bf16.msra.mxu0 0
  %55 = vmatpush.bf16.msra.mxu0 0
  %56 = vmatpush.bf16.msra.mxu0 0
  %57 = vmatpush.bf16.msra.mxu0 0
  %58 = vmatpush.bf16.msra.mxu0 0
  %59 = vmatpush.bf16.msra.mxu0 %v46
  %60 = vmatpush.bf16.msra.mxu0 %v45
  %61 = vmatmul.bf16.gmra.mxu0 %v51
  %v62 = vpop.f32.mrf.mxu0
  %v63 = vadd.f32 %v30, %v62
  %v64 = vpop.f32.mrf.mxu0
  %v65 = vadd.f32 %v30, %v64
  %66 = vdwg.mxu0
  %v67 = vmax.f32 %v63, 0.0
  %v68 = vmax.f32 %v65, 0.0
  %v69 = vld [vmem:[%s3] sm:$0xff]
  %v70 = vld [vmem:[%s3 + $0x8] sm:$0xff]
  %v71 = vld [vmem:[%s3 + $0x10] sm:$0xff]
  %v72 = vld [vmem:[%s3 + $0x18] sm:$0xff]
  %v73 = vld [vmem:[%s3 + $0x20] sm:$0xff]
  %v74 = vld [vmem:[%s3 + $0x28] sm:$0xff]
  %v75 = vld [vmem:[%s3 + $0x30] sm:$0xff]
  %v76 = vld [vmem:[%s3 + $0x38] sm:$0xff]
  %v78 = vperm.slane %v24, 0
  %vm80 = vcmask 523264
  %v82 = vsel %vm80, %v67, 0
  %v85 = vsel %vm80, %v68, 0
  %87 = vmatpush.msra.mxu0 0.0
  %88 = vmatpush.msra.mxu0 0.0
  %89 = vmatpush.msra.mxu0 0.0
  %90 = vmatpush.msra.mxu0 0.0
  %91 = vmatpush.msra.mxu0 0.0
  %92 = vmatpush.msra.mxu0 0.0
  %93 = vmatpush.msra.mxu0 0.0
  %94 = vmatpush.msra.mxu0 0.0
  %95 = vmatpush.msra.mxu0 %v76
  %96 = vmatpush.msra.mxu0 %v75
  %97 = vmatpush.msra.mxu0 %v74
  %98 = vmatpush.msra.mxu0 %v73
  %99 = vmatpush.msra.mxu0 %v72
  %100 = vmatpush.msra.mxu0 %v71
  %101 = vmatpush.msra.mxu0 %v70
  %102 = vmatpush.msra.mxu0 %v69
  %103 = vmatmul.f32.gmra.mxu0 %v82
  %v104 = vpop.f32.mrf.mxu0
  %v105 = vadd.f32 %v78, %v104
  %106 = vmatmul.f32.gmra.mxu0 %v85
  %v107 = vpop.f32.mrf.mxu0
  %v108 = vadd.f32 %v78, %v107
  %109 = vdwg.mxu0
  %112 = vrot.lane.b32.xlu0 %v105, 127
  %v113 = vpop.permute.xlu0 %112
  %114 = vrot.lane.b32.xlu0 %v108, 127
  %v115 = vpop.permute.xlu0 %114
  %v118 = vmax.f32 %v105, %v113
  %v119 = vmax.f32 %v108, %v115
  %v120 = vsub.f32 %v105, %v113
  %v121 = vsub.f32 %v108, %v115
  %v122 = vand.u32 2147483647, %v120
  %v123 = vand.u32 2147483647, %v121
  %v124 = vsub.f32 0.0, %v122
  %v125 = vsub.f32 0.0, %v123
  %v126 = vmul.f32 %v124, 1.442695
  %v127 = vpow.pop %v126
  %v128 = vmul.f32 %v125, 1.442695
  %v129 = vpow.pop %v128
  %v130 = vadd.f32 %v127, 1.0
  %v131 = vlog2.pop %v130
  %v132 = vmul.f32 %v131, 0.6931472
  %v133 = vmul.f32 -0.5, %v127
  %v134 = vadd.f32 %v133, 1.0
  %v135 = vmul.f32 %v134, %v127
  %v136 = vand.u32 2147483647, %v127
  %vm137 = vcmp.lt.f32.partialorder %v136, 0.0004427343
  %v138 = vsel %vm137, %v135, %v132
  %v139 = vadd.f32 %v129, 1.0
  %v140 = vlog2.pop %v139
  %v141 = vmul.f32 %v140, 0.6931472
  %v142 = vmul.f32 -0.5, %v129
  %v143 = vadd.f32 %v142, 1.0
  %v144 = vmul.f32 %v143, %v129
  %v145 = vand.u32 2147483647, %v129
  %vm146 = vcmp.lt.f32.partialorder %v145, 0.0004427343
  %v147 = vsel %vm146, %v144, %v141
  %v148 = vadd.f32 %v118, %v138
  %v149 = vadd.f32 %v119, %v147
  %151 = vset.pattern.permute.xlu0 0
  %152 = vperm.xlu0 %151, %v148
  %v153 = vpop.permute.xlu0 %152
  %156 = vset.pattern.permute.xlu0 0
  %157 = vperm.xlu0 %156, %v149
  %v158 = vpop.permute.xlu0 %157
  %v160 = vsub.f32 %v105, %v153
  %v161 = vsub.f32 %v108, %v158
  %vm162 = vcmask 15360
  %163 = vst.msk [vmem:[%s5] sm:$0xff] %vm162, %v160
  %164 = vst.msk [vmem:[%s5 + $0x8] sm:$0xff] %vm162, %v161
  // Predicated region
  $region22: #{tpu_custom_call.1} parent=0 // pred_check
    _
  $region23: #{tpu_custom_call.1} parent=0 // pred_check_branch
    %166 = sbr.rel (0) target = $region25
  $region24: #{tpu_custom_call.1} parent=0 // pred_region
    _
  $region25: #{tpu_custom_call.1} parent=0 // pred_fallthru
    _
  // Predicated region
  $region26: #{tpu_custom_call.1} parent=0 // pred_check
    _
  $region27: #{tpu_custom_call.1} parent=0 // pred_check_branch
    %168 = sbr.rel (0) target = $region29
  $region28: #{tpu_custom_call.1} parent=0 // pred_region
    _
  $region29: #{tpu_custom_call.1} parent=0 // pred_fallthru
    _

</llo_original>
